<compile_context>
chip_gen: v5e
topology: v5e:2x2
jax: 0.10.0
libtpu: 0.0.40
codegen_flags: <defaults>
</compile_context>

<pallas_src>
import jax
import jax.numpy as jnp
from jax.experimental import pallas as pl
from jax.experimental.pallas import tpu as pltpu


# ----------------------------------------------------------------------------
# Kernel: full forward pass for one lane-tile of tile_n collocation points.
# All activations are kept transposed: h has shape (H, tile_n), batch on lanes.
# ----------------------------------------------------------------------------
def lr_pinn_kernel(x_ref, t_ref, swx_ref, swt_ref, sb_ref,
                   w0_ref, w1_ref, w2_ref,
                   ew_ref, eb_ref, out_ref):
    # start layer on the VPU (K=2 "matmul" as two broadcast FMAs) + tanh
    #   (H,1)*(1,TN) + (H,1)*(1,TN) + (H,1)  ->  (H, TN)
    h = jnp.tanh(swx_ref[...] * x_ref[...]
                 + swt_ref[...] * t_ref[...]
                 + sb_ref[...])

    # three dense hidden layers, W_i^T precomputed in the wrapper:
    #   h <- tanh(W_i^T @ h) : (H, H) @ (H, TN) -> (H, TN)
    for w_ref in (w0_ref, w1_ref, w2_ref):
        h = jnp.tanh(jnp.dot(w_ref[...], h,
                             preferred_element_type=jnp.float32))

    # end layer: (1, H) @ (H, TN) + b  ->  lane-dense (1, TN) output row
    out_ref[...] = (
        jnp.dot(ew_ref[...], h, preferred_element_type=jnp.float32) + eb_ref[0]
    )


# ----------------------------------------------------------------------------
# Wrapper: layout glue (transpose-free, alpha folded, dense W_i^T) + pallas_call.
# ----------------------------------------------------------------------------
def lr_pinn_forward(x, t, params, *, tile_n=2048):
    N = x.shape[0]
    H = params["start_w"].shape[0]      # hidden_dim
    f32 = jnp.float32

    assert tile_n % 128 == 0, "tile_n must be a multiple of the 128-lane width"
    n128 = pl.cdiv(N, 128) * 128
    if n128 >= 256:
        # keep grid >= 2 whenever the batch permits (v7x has 2 TensorCores and
        # the "parallel" grid axis is sharded across them)
        tile_n = min(tile_n, (n128 // 2 // 128) * 128)
    else:
        tile_n = 128
    n_pad = pl.cdiv(N, tile_n) * tile_n
    grid = (n_pad // tile_n,)

    # ---- plain-JAX layout glue (all math-preserving, no (N,2) relayout) ----
    xr = jnp.pad(x.reshape(1, N).astype(f32), ((0, 0), (0, n_pad - N)))  # (1, n_pad)
    tr = jnp.pad(t.reshape(1, N).astype(f32), ((0, 0), (0, n_pad - N)))  # (1, n_pad)

    sw = params["start_w"].astype(f32)                  # (H, 2)
    swx = sw[:, 0:1]                                    # (H, 1)
    swt = sw[:, 1:2]                                    # (H, 1)
    sb = params["start_b"].reshape(H, 1).astype(f32)    # (H, 1)
    ew = params["end_w"].reshape(1, H).astype(f32)      # (1, H)
    eb = params["end_b"].reshape(1).astype(f32)         # SMEM scalar

    # dense, grid-invariant hidden weights (transposed for the h = W^T @ h form)
    wts = [
        ((params[f"col_{i}"] * params[f"alpha_{i}"][None, :])
         @ params[f"row_{i}"]).T.astype(f32)            # (H, H)
        for i in range(3)
    ]

    def fixed(shape):
        # whole-array VMEM block, identical for every grid step (weights/biases)
        return pl.BlockSpec(shape, lambda i: (0, 0))

    in_specs = [
        pl.BlockSpec((1, tile_n), lambda i: (0, i)),        # x row tile
        pl.BlockSpec((1, tile_n), lambda i: (0, i)),        # t row tile
        fixed((H, 1)),                                      # start_w[:, 0]
        fixed((H, 1)),                                      # start_w[:, 1]
        fixed((H, 1)),                                      # start_b
        fixed((H, H)), fixed((H, H)), fixed((H, H)),        # W_0^T, W_1^T, W_2^T
        fixed((1, H)),                                      # end_w
        pl.BlockSpec(memory_space=pltpu.MemorySpace.SMEM),  # end_b scalar
    ]
    out_spec = pl.BlockSpec((1, tile_n), lambda i: (0, i))  # lane-dense output row

    out = pl.pallas_call(
        lr_pinn_kernel,
        out_shape=jax.ShapeDtypeStruct((1, n_pad), jnp.float32),
        grid=grid,
        in_specs=in_specs,
        out_specs=out_spec,
        compiler_params=pltpu.CompilerParams(
            dimension_semantics=("parallel",)),
    )(xr, tr, swx, swt, sb, wts[0], wts[1], wts[2], ew, eb)

    # back to the PyTorch (N, 1) convention
    return out[0, :N].reshape(N, 1)


# ----------------------------------------------------------------------------
# Pure-JAX reference (mirrors the PyTorch forward exactly)
# ----------------------------------------------------------------------------
def lr_pinn_reference(x, t, p):
    inputs = jnp.concatenate([x, t], axis=1)
    h = jnp.tanh(inputs @ p["start_w"].T + p["start_b"])
    for i in range(3):
        w = (p[f"col_{i}"] @ jnp.diag(p[f"alpha_{i}"])) @ p[f"row_{i}"]
        h = jnp.tanh(h @ w)
    return h @ p["end_w"].T + p["end_b"]


if __name__ == "__main__":
    hidden_dim = 32
    rank = 8
    N = 1024  # batch of collocation points -> tile_n clamps to 512, grid = (2,)

    key = jax.random.PRNGKey(0)
    ks = jax.random.split(key, 16)

    params = {
        "start_w": jax.random.normal(ks[0], (hidden_dim, 2), jnp.float32) * 0.5,
        "start_b": jax.random.normal(ks[1], (hidden_dim,), jnp.float32) * 0.1,
        "end_w":   jax.random.normal(ks[2], (1, hidden_dim), jnp.float32) * 0.5,
        "end_b":   jax.random.normal(ks[3], (1,), jnp.float32) * 0.1,
        "col_0":   jax.random.normal(ks[4], (hidden_dim, rank), jnp.float32) * 0.3,
        "col_1":   jax.random.normal(ks[5], (hidden_dim, rank), jnp.float32) * 0.3,
        "col_2":   jax.random.normal(ks[6], (hidden_dim, rank), jnp.float32) * 0.3,
        "row_0":   jax.random.normal(ks[7], (rank, hidden_dim), jnp.float32) * 0.3,
        "row_1":   jax.random.normal(ks[8], (rank, hidden_dim), jnp.float32) * 0.3,
        "row_2":   jax.random.normal(ks[9], (rank, hidden_dim), jnp.float32) * 0.3,
        "alpha_0": jax.random.normal(ks[10], (rank,), jnp.float32),
        "alpha_1": jax.random.normal(ks[11], (rank,), jnp.float32),
        "alpha_2": jax.random.normal(ks[12], (rank,), jnp.float32),
    }

    x = jax.random.uniform(ks[13], (N, 1), jnp.float32)
    t = jax.random.uniform(ks[14], (N, 1), jnp.float32)

    out = jax.block_until_ready(lr_pinn_forward(x, t, params))
    ref = jax.block_until_ready(lr_pinn_reference(x, t, params))

    assert out.shape == (N, 1)
    assert jnp.allclose(out, ref, atol=3e-5, rtol=1e-4), "mismatch vs reference"

    print("KERNEL_OK")
</pallas_src>

<mosaic_0001>
module attributes {stable_mosaic.version = 11 : i64} {
  func.func @lr_pinn_kernel(%arg0: i32, %arg1: memref<1x512xf32, #tpu.memory_space<vmem>>, %arg2: memref<1x512xf32, #tpu.memory_space<vmem>>, %arg3: memref<32x1xf32, #tpu.memory_space<vmem>>, %arg4: memref<32x1xf32, #tpu.memory_space<vmem>>, %arg5: memref<32x1xf32, #tpu.memory_space<vmem>>, %arg6: memref<32x32xf32, #tpu.memory_space<vmem>>, %arg7: memref<32x32xf32, #tpu.memory_space<vmem>>, %arg8: memref<32x32xf32, #tpu.memory_space<vmem>>, %arg9: memref<1x32xf32, #tpu.memory_space<vmem>>, %arg10: memref<1xf32, #tpu.memory_space<smem>>, %arg11: memref<1x512xf32, #tpu.memory_space<vmem>>) attributes {dimension_semantics = [#tpu.dimension_semantics<parallel>], iteration_bounds = array<i64: 2>, scalar_prefetch = 0 : i64, scratch_operands = 0 : i64, tpu.core_type = #tpu.core_type<tc>, window_params = [{transform_indices = @transform_0, window_bounds = array<i64: 1, 512>}, {transform_indices = @transform_1, window_bounds = array<i64: 1, 512>}, {pipeline_mode = #tpu.pipeline_mode<synchronous>, transform_indices = @transform_2, window_bounds = array<i64: 32, 1>}, {pipeline_mode = #tpu.pipeline_mode<synchronous>, transform_indices = @transform_3, window_bounds = array<i64: 32, 1>}, {pipeline_mode = #tpu.pipeline_mode<synchronous>, transform_indices = @transform_4, window_bounds = array<i64: 32, 1>}, {pipeline_mode = #tpu.pipeline_mode<synchronous>, transform_indices = @transform_5, window_bounds = array<i64: 32, 32>}, {pipeline_mode = #tpu.pipeline_mode<synchronous>, transform_indices = @transform_6, window_bounds = array<i64: 32, 32>}, {pipeline_mode = #tpu.pipeline_mode<synchronous>, transform_indices = @transform_7, window_bounds = array<i64: 32, 32>}, {pipeline_mode = #tpu.pipeline_mode<synchronous>, transform_indices = @transform_8, window_bounds = array<i64: 1, 32>}, {transform_indices = @transform_9, window_bounds = array<i64: 1>}, {transform_indices = @transform_10, window_bounds = array<i64: 1, 512>}]} {
    %c0 = arith.constant 0 : index
    %c0_0 = arith.constant 0 : index
    %0 = vector.load %arg3[%c0, %c0_0] : memref<32x1xf32, #tpu.memory_space<vmem>>, vector<32x1xf32>
    %c0_1 = arith.constant 0 : index
    %c0_2 = arith.constant 0 : index
    %1 = vector.load %arg1[%c0_1, %c0_2] : memref<1x512xf32, #tpu.memory_space<vmem>>, vector<1x512xf32>
    %2 = vector.broadcast %0 : vector<32x1xf32> to vector<32x512xf32>
    %3 = vector.broadcast %1 : vector<1x512xf32> to vector<32x512xf32>
    %4 = arith.mulf %2, %3 : vector<32x512xf32>
    %c0_3 = arith.constant 0 : index
    %c0_4 = arith.constant 0 : index
    %5 = vector.load %arg4[%c0_3, %c0_4] : memref<32x1xf32, #tpu.memory_space<vmem>>, vector<32x1xf32>
    %c0_5 = arith.constant 0 : index
    %c0_6 = arith.constant 0 : index
    %6 = vector.load %arg2[%c0_5, %c0_6] : memref<1x512xf32, #tpu.memory_space<vmem>>, vector<1x512xf32>
    %7 = vector.broadcast %5 : vector<32x1xf32> to vector<32x512xf32>
    %8 = vector.broadcast %6 : vector<1x512xf32> to vector<32x512xf32>
    %9 = arith.mulf %7, %8 : vector<32x512xf32>
    %10 = arith.addf %4, %9 : vector<32x512xf32>
    %c0_7 = arith.constant 0 : index
    %c0_8 = arith.constant 0 : index
    %11 = vector.load %arg5[%c0_7, %c0_8] : memref<32x1xf32, #tpu.memory_space<vmem>>, vector<32x1xf32>
    %12 = vector.broadcast %11 : vector<32x1xf32> to vector<32x512xf32>
    %13 = arith.addf %10, %12 : vector<32x512xf32>
    %14 = math.tanh %13 : vector<32x512xf32>
    %c0_9 = arith.constant 0 : index
    %c0_10 = arith.constant 0 : index
    %15 = vector.load %arg6[%c0_9, %c0_10] : memref<32x32xf32, #tpu.memory_space<vmem>>, vector<32x32xf32>
    %cst = arith.constant dense<0.000000e+00> : vector<32x512xf32>
    %16 = tpu.matmul %15, %14, %cst {dimension_numbers = #tpu.dot_dimension_numbers<[1], [0], [0], [1], [0, 0, 1, 1], [], []>} : vector<32x32xf32>, vector<32x512xf32>, vector<32x512xf32> -> vector<32x512xf32>
    %17 = math.tanh %16 : vector<32x512xf32>
    %c0_11 = arith.constant 0 : index
    %c0_12 = arith.constant 0 : index
    %18 = vector.load %arg7[%c0_11, %c0_12] : memref<32x32xf32, #tpu.memory_space<vmem>>, vector<32x32xf32>
    %cst_13 = arith.constant dense<0.000000e+00> : vector<32x512xf32>
    %19 = tpu.matmul %18, %17, %cst_13 {dimension_numbers = #tpu.dot_dimension_numbers<[1], [0], [0], [1], [0, 0, 1, 1], [], []>} : vector<32x32xf32>, vector<32x512xf32>, vector<32x512xf32> -> vector<32x512xf32>
    %20 = math.tanh %19 : vector<32x512xf32>
    %c0_14 = arith.constant 0 : index
    %c0_15 = arith.constant 0 : index
    %21 = vector.load %arg8[%c0_14, %c0_15] : memref<32x32xf32, #tpu.memory_space<vmem>>, vector<32x32xf32>
    %cst_16 = arith.constant dense<0.000000e+00> : vector<32x512xf32>
    %22 = tpu.matmul %21, %20, %cst_16 {dimension_numbers = #tpu.dot_dimension_numbers<[1], [0], [0], [1], [0, 0, 1, 1], [], []>} : vector<32x32xf32>, vector<32x512xf32>, vector<32x512xf32> -> vector<32x512xf32>
    %23 = math.tanh %22 : vector<32x512xf32>
    %c0_17 = arith.constant 0 : index
    %c0_18 = arith.constant 0 : index
    %24 = vector.load %arg9[%c0_17, %c0_18] : memref<1x32xf32, #tpu.memory_space<vmem>>, vector<1x32xf32>
    %cst_19 = arith.constant dense<0.000000e+00> : vector<1x512xf32>
    %25 = tpu.matmul %24, %23, %cst_19 {dimension_numbers = #tpu.dot_dimension_numbers<[1], [0], [0], [1], [0, 0, 1, 1], [], []>} : vector<1x32xf32>, vector<32x512xf32>, vector<1x512xf32> -> vector<1x512xf32>
    %c0_20 = arith.constant 0 : index
    %26 = memref.load %arg10[%c0_20] : memref<1xf32, #tpu.memory_space<smem>>
    %27 = vector.broadcast %26 : f32 to vector<1x512xf32>
    %28 = arith.addf %25, %27 : vector<1x512xf32>
    %c0_21 = arith.constant 0 : index
    %c0_22 = arith.constant 0 : index
    %29 = vector.load %arg11[%c0_21, %c0_22] : memref<1x512xf32, #tpu.memory_space<vmem>>, vector<1x512xf32>
    tpu.vector_store %arg11[%c0_21, %c0_22], %28 {strides = array<i32>} : memref<1x512xf32, #tpu.memory_space<vmem>>, vector<1x512xf32>,
    return
  }
  func.func @transform_0(%arg0: i32) -> (i32, i32) {
    %c0_i32 = arith.constant 0 : i32
    %c0_i32_0 = arith.constant 0 : i32
    return %c0_i32, %arg0 : i32, i32
  }
  func.func @transform_1(%arg0: i32) -> (i32, i32) {
    %c0_i32 = arith.constant 0 : i32
    %c0_i32_0 = arith.constant 0 : i32
    return %c0_i32, %arg0 : i32, i32
  }
  func.func @transform_2(%arg0: i32) -> (i32, i32) {
    %c0_i32 = arith.constant 0 : i32
    %c0_i32_0 = arith.constant 0 : i32
    %c0_i32_1 = arith.constant 0 : i32
    return %c0_i32, %c0_i32_0 : i32, i32
  }
  func.func @transform_3(%arg0: i32) -> (i32, i32) {
    %c0_i32 = arith.constant 0 : i32
    %c0_i32_0 = arith.constant 0 : i32
    %c0_i32_1 = arith.constant 0 : i32
    return %c0_i32, %c0_i32_0 : i32, i32
  }
  func.func @transform_4(%arg0: i32) -> (i32, i32) {
    %c0_i32 = arith.constant 0 : i32
    %c0_i32_0 = arith.constant 0 : i32
    %c0_i32_1 = arith.constant 0 : i32
    return %c0_i32, %c0_i32_0 : i32, i32
  }
  func.func @transform_5(%arg0: i32) -> (i32, i32) {
    %c0_i32 = arith.constant 0 : i32
    %c0_i32_0 = arith.constant 0 : i32
    %c0_i32_1 = arith.constant 0 : i32
    return %c0_i32, %c0_i32_0 : i32, i32
  }
  func.func @transform_6(%arg0: i32) -> (i32, i32) {
    %c0_i32 = arith.constant 0 : i32
    %c0_i32_0 = arith.constant 0 : i32
    %c0_i32_1 = arith.constant 0 : i32
    return %c0_i32, %c0_i32_0 : i32, i32
  }
  func.func @transform_7(%arg0: i32) -> (i32, i32) {
    %c0_i32 = arith.constant 0 : i32
    %c0_i32_0 = arith.constant 0 : i32
    %c0_i32_1 = arith.constant 0 : i32
    return %c0_i32, %c0_i32_0 : i32, i32
  }
  func.func @transform_8(%arg0: i32) -> (i32, i32) {
    %c0_i32 = arith.constant 0 : i32
    %c0_i32_0 = arith.constant 0 : i32
    %c0_i32_1 = arith.constant 0 : i32
    return %c0_i32, %c0_i32_0 : i32, i32
  }
  func.func @transform_9(%arg0: i32) -> i32 {
    %c0_i32 = arith.constant 0 : i32
    %c0_i32_0 = arith.constant 0 : i32
    return %c0_i32 : i32
  }
  func.func @transform_10(%arg0: i32) -> (i32, i32) {
    %c0_i32 = arith.constant 0 : i32
    %c0_i32_0 = arith.constant 0 : i32
    return %c0_i32, %arg0 : i32, i32
  }
}

</mosaic_0001>

<llo_original>
// kernel: tpu_custom_call.1
$region0: #{tpu_custom_call.1}
  #allocation0 [shape = 'u32[]', space=smem, size = 0x4, offset = 0x4, fixed_abs, tag = 'smem constant byte address 0x4 - core index']
  #allocation1 [shape = 'u32[72,128]{1,0:T(1,128)}', space=vmem, size = 0x9000, scoped, tag = 'internal scratch']
  #allocation2 [shape = 'f32[1]{0:T(128)S(6)}', space=smem, size = 0x200, scoped, tag = 'scoped memory for tpu_custom_call.1']
  %s0 = inlined_call_operand.hbm [shape: f32[1,1024], index: 0, kind: input, shape index: {}]
  %s1 = inlined_call_operand.hbm [shape: f32[1,1024], index: 1, kind: input, shape index: {}]
  %s2 = inlined_call_operand.vmem [shape: f32[32,1], index: 2, kind: input, shape index: {}]
  %s3 = inlined_call_operand.vmem [shape: f32[32,1], index: 3, kind: input, shape index: {}]
  %s4 = inlined_call_operand.vmem [shape: f32[32,1], index: 4, kind: input, shape index: {}]
  %s5 = inlined_call_operand.vmem [shape: f32[32,32], index: 5, kind: input, shape index: {}]
  %s6 = inlined_call_operand.vmem [shape: f32[32,32], index: 6, kind: input, shape index: {}]
  %s7 = inlined_call_operand.vmem [shape: f32[32,32], index: 7, kind: input, shape index: {}]
  %s8 = inlined_call_operand.vmem [shape: f32[1,32], index: 8, kind: input, shape index: {}]
  %s9 = inlined_call_operand.<no memory space> [shape: f32[1], index: 9, kind: input, shape index: {}]
  %s10 = inlined_call_operand.hbm [shape: f32[1,1024], index: 10, kind: output, shape index: {}]
  %s11 = sld [smem:[#allocation0]]
  $region81: #{tpu_custom_call.1} parent=0
    _
  %s13 = ssub.s32 1, %s11
  %s14 = scalar_select 0, %s13, %s11
  %15 = sst [smem:[#allocation2]] %s9
  $region1: #{tpu_custom_call.1} parent=0
    #allocation3 [shape = 'u8[4096]{0}', space=vmem, size = 0x1000, scoped, tag = 'input window, operand 0']
    #allocation4 [shape = 's32[2]{0}', space=sflag, size = 0x8, scoped, tag = 'scoped memory for tpu_custom_call.1']
    #allocation5 [shape = 's32[2]{0}', space=sflag, size = 0x8, scoped, tag = 'scoped memory for tpu_custom_call.1']
    #allocation6 [shape = 'u8[4096]{0}', space=vmem, size = 0x1000, scoped, tag = 'input window, operand 1']
    #allocation7 [shape = 's32[2]{0}', space=sflag, size = 0x8, scoped, tag = 'scoped memory for tpu_custom_call.1']
    #allocation8 [shape = 'u8[4096]{0}', space=vmem, size = 0x1000, scoped, tag = 'output window, operand 0']
    %16 = vsyncpa [#allocation4], 0
    %s17 = scalar_lea.sflag [#allocation4], 1
    %18 = vsyncpa %s17, 0
    %19 = vsyncpa [#allocation7], 0
    %s20 = scalar_lea.sflag [#allocation7], 1
    %21 = vsyncpa %s20, 0
    %22 = vsyncpa [#allocation5], 0
    %s23 = scalar_lea.sflag [#allocation5], 1
    %24 = vsyncpa %s23, 0
    loop: start=0, step=1, limit=4
    $region2: #{tpu_custom_call.1} parent=1 // loop_pre_header
      _
    $region3: #{tpu_custom_call.1} parent=1 // loop_header
      %s26 = sphi 0, %s30
      %p27 = scmp.ge.s32.totalorder %s26, 4
      %s36 = sphi 0, %s38
      %s39 = sphi 0, %s36
      %s40 = sphi 0, %s39
      %s56 = sphi 0, %s40
      %s62 = sphi 0, %s64
      %s65 = sphi 0, %s62
      %s66 = sphi 0, %s65
      %s82 = sphi 0, %s66
      %s86 = sphi 0, %s86
      %s88 = sphi 0, %s86
      %s89 = sphi 0, %s88
      %s103 = sphi 0, %s89
      %s107 = sphi 0, %s107
      %s109 = sphi 0, %s107
      %s110 = sphi 0, %s109
      %s124 = sphi 0, %s110
      %s128 = sphi 0, %s128
      %s130 = sphi 0, %s128
      %s131 = sphi 0, %s130
      %s145 = sphi 0, %s131
      %s149 = sphi 0, %s149
      %s151 = sphi 0, %s149
      %s152 = sphi 0, %s151
      %s166 = sphi 0, %s152
      %s170 = sphi 0, %s170
      %s172 = sphi 0, %s170
      %s173 = sphi 0, %s172
      %s187 = sphi 0, %s173
      %s191 = sphi 0, %s191
      %s193 = sphi 0, %s191
      %s194 = sphi 0, %s193
      %s208 = sphi 0, %s194
      %s212 = sphi 0, %s212
      %s214 = sphi 0, %s212
      %s215 = sphi 0, %s214
      %s229 = sphi 0, %s215
      %s233 = sphi 0, %s233
      %s235 = sphi 0, %s233
      %s236 = sphi 0, %s235
      %s250 = sphi 0, %s236
      %s256 = sphi 0, %s258
      %s259 = sphi 0, %s256
      %s260 = sphi 0, %s259
      %s276 = sphi 0, %s260
    $region4: #{tpu_custom_call.1} parent=1 // loop_header_branch
      %29 = sbr.rel (%p27) target = $region8
    $region5: #{tpu_custom_call.1} parent=1 // loop_body
      %s31 = ssub.s32 %s26, 1
      %s32 = ssub.s32 %s26, 2
      %s33 = sadd.s32 %s26, 1
      %s34 = ssub.s32 %s26, %s33
      %p35 = scmp.eq.s32.totalorder %s34, 0
      %s37 = sadd.s32 %s36, 1
      %s38 = scalar_select %p35, %s36, %s37
      %p41 = pneg %p35
      %p42 = scmp.eq.s32.totalorder %s26, 1
      %p43 = por %p41, %p42
      %p44 = scmp.ne.s32.totalorder %s36, %s39
      %p45 = scmp.eq.s32.totalorder %s26, 0
      %p46 = por %p44, %p45
      %p47 = scmp.ne.s32.totalorder %s36, %s39
      %p48 = scmp.eq.s32.totalorder %s31, 1
      %p49 = por %p47, %p48
      %p50 = scmp.ne.s32.totalorder %s39, %s40
      %p51 = scmp.eq.s32.totalorder %s31, 0
      %p52 = por %p50, %p51
      %p53 = scmp.ne.s32.totalorder %s39, %s40
      %p54 = scmp.eq.s32.totalorder %s32, 1
      %p55 = por %p53, %p54
      %p57 = scmp.ne.s32.totalorder %s40, %s56
      %p58 = scmp.eq.s32.totalorder %s32, 0
      %p59 = por %p57, %p58
      %s60 = ssub.s32 %s26, %s33
      %p61 = scmp.eq.s32.totalorder %s60, 0
      %s63 = sadd.s32 %s62, 1
      %s64 = scalar_select %p61, %s62, %s63
      %p67 = pneg %p61
      %p68 = scmp.eq.s32.totalorder %s26, 1
      %p69 = por %p67, %p68
      %p70 = scmp.ne.s32.totalorder %s62, %s65
      %p71 = scmp.eq.s32.totalorder %s26, 0
      %p72 = por %p70, %p71
      %p73 = scmp.ne.s32.totalorder %s62, %s65
      %p74 = scmp.eq.s32.totalorder %s31, 1
      %p75 = por %p73, %p74
      %p76 = scmp.ne.s32.totalorder %s65, %s66
      %p77 = scmp.eq.s32.totalorder %s31, 0
      %p78 = por %p76, %p77
      %p79 = scmp.ne.s32.totalorder %s65, %s66
      %p80 = scmp.eq.s32.totalorder %s32, 1
      %p81 = por %p79, %p80
      %p83 = scmp.ne.s32.totalorder %s66, %s82
      %p84 = scmp.eq.s32.totalorder %s32, 0
      %p85 = por %p83, %p84
      %s87 = sadd.s32 %s86, 1
      %p90 = scmp.eq.s32.totalorder %s26, 1
      %p91 = scmp.ne.s32.totalorder %s86, %s88
      %p92 = scmp.eq.s32.totalorder %s26, 0
      %p93 = por %p91, %p92
      %p94 = scmp.ne.s32.totalorder %s86, %s88
      %p95 = scmp.eq.s32.totalorder %s31, 1
      %p96 = por %p94, %p95
      %p97 = scmp.ne.s32.totalorder %s88, %s89
      %p98 = scmp.eq.s32.totalorder %s31, 0
      %p99 = por %p97, %p98
      %p100 = scmp.ne.s32.totalorder %s88, %s89
      %p101 = scmp.eq.s32.totalorder %s32, 1
      %p102 = por %p100, %p101
      %p104 = scmp.ne.s32.totalorder %s89, %s103
      %p105 = scmp.eq.s32.totalorder %s32, 0
      %p106 = por %p104, %p105
      %s108 = sadd.s32 %s107, 1
      %p111 = scmp.eq.s32.totalorder %s26, 1
      %p112 = scmp.ne.s32.totalorder %s107, %s109
      %p113 = scmp.eq.s32.totalorder %s26, 0
      %p114 = por %p112, %p113
      %p115 = scmp.ne.s32.totalorder %s107, %s109
      %p116 = scmp.eq.s32.totalorder %s31, 1
      %p117 = por %p115, %p116
      %p118 = scmp.ne.s32.totalorder %s109, %s110
      %p119 = scmp.eq.s32.totalorder %s31, 0
      %p120 = por %p118, %p119
      %p121 = scmp.ne.s32.totalorder %s109, %s110
      %p122 = scmp.eq.s32.totalorder %s32, 1
      %p123 = por %p121, %p122
      %p125 = scmp.ne.s32.totalorder %s110, %s124
      %p126 = scmp.eq.s32.totalorder %s32, 0
      %p127 = por %p125, %p126
      %s129 = sadd.s32 %s128, 1
      %p132 = scmp.eq.s32.totalorder %s26, 1
      %p133 = scmp.ne.s32.totalorder %s128, %s130
      %p134 = scmp.eq.s32.totalorder %s26, 0
      %p135 = por %p133, %p134
      %p136 = scmp.ne.s32.totalorder %s128, %s130
      %p137 = scmp.eq.s32.totalorder %s31, 1
      %p138 = por %p136, %p137
      %p139 = scmp.ne.s32.totalorder %s130, %s131
      %p140 = scmp.eq.s32.totalorder %s31, 0
      %p141 = por %p139, %p140
      %p142 = scmp.ne.s32.totalorder %s130, %s131
      %p143 = scmp.eq.s32.totalorder %s32, 1
      %p144 = por %p142, %p143
      %p146 = scmp.ne.s32.totalorder %s131, %s145
      %p147 = scmp.eq.s32.totalorder %s32, 0
      %p148 = por %p146, %p147
      %s150 = sadd.s32 %s149, 1
      %p153 = scmp.eq.s32.totalorder %s26, 1
      %p154 = scmp.ne.s32.totalorder %s149, %s151
      %p155 = scmp.eq.s32.totalorder %s26, 0
      %p156 = por %p154, %p155
      %p157 = scmp.ne.s32.totalorder %s149, %s151
      %p158 = scmp.eq.s32.totalorder %s31, 1
      %p159 = por %p157, %p158
      %p160 = scmp.ne.s32.totalorder %s151, %s152
      %p161 = scmp.eq.s32.totalorder %s31, 0
      %p162 = por %p160, %p161
      %p163 = scmp.ne.s32.totalorder %s151, %s152
      %p164 = scmp.eq.s32.totalorder %s32, 1
      %p165 = por %p163, %p164
      %p167 = scmp.ne.s32.totalorder %s152, %s166
      %p168 = scmp.eq.s32.totalorder %s32, 0
      %p169 = por %p167, %p168
      %s171 = sadd.s32 %s170, 1
      %p174 = scmp.eq.s32.totalorder %s26, 1
      %p175 = scmp.ne.s32.totalorder %s170, %s172
      %p176 = scmp.eq.s32.totalorder %s26, 0
      %p177 = por %p175, %p176
      %p178 = scmp.ne.s32.totalorder %s170, %s172
      %p179 = scmp.eq.s32.totalorder %s31, 1
      %p180 = por %p178, %p179
      %p181 = scmp.ne.s32.totalorder %s172, %s173
      %p182 = scmp.eq.s32.totalorder %s31, 0
      %p183 = por %p181, %p182
      %p184 = scmp.ne.s32.totalorder %s172, %s173
      %p185 = scmp.eq.s32.totalorder %s32, 1
      %p186 = por %p184, %p185
      %p188 = scmp.ne.s32.totalorder %s173, %s187
      %p189 = scmp.eq.s32.totalorder %s32, 0
      %p190 = por %p188, %p189
      %s192 = sadd.s32 %s191, 1
      %p195 = scmp.eq.s32.totalorder %s26, 1
      %p196 = scmp.ne.s32.totalorder %s191, %s193
      %p197 = scmp.eq.s32.totalorder %s26, 0
      %p198 = por %p196, %p197
      %p199 = scmp.ne.s32.totalorder %s191, %s193
      %p200 = scmp.eq.s32.totalorder %s31, 1
      %p201 = por %p199, %p200
      %p202 = scmp.ne.s32.totalorder %s193, %s194
      %p203 = scmp.eq.s32.totalorder %s31, 0
      %p204 = por %p202, %p203
      %p205 = scmp.ne.s32.totalorder %s193, %s194
      %p206 = scmp.eq.s32.totalorder %s32, 1
      %p207 = por %p205, %p206
      %p209 = scmp.ne.s32.totalorder %s194, %s208
      %p210 = scmp.eq.s32.totalorder %s32, 0
      %p211 = por %p209, %p210
      %s213 = sadd.s32 %s212, 1
      %p216 = scmp.eq.s32.totalorder %s26, 1
      %p217 = scmp.ne.s32.totalorder %s212, %s214
      %p218 = scmp.eq.s32.totalorder %s26, 0
      %p219 = por %p217, %p218
      %p220 = scmp.ne.s32.totalorder %s212, %s214
      %p221 = scmp.eq.s32.totalorder %s31, 1
      %p222 = por %p220, %p221
      %p223 = scmp.ne.s32.totalorder %s214, %s215
      %p224 = scmp.eq.s32.totalorder %s31, 0
      %p225 = por %p223, %p224
      %p226 = scmp.ne.s32.totalorder %s214, %s215
      %p227 = scmp.eq.s32.totalorder %s32, 1
      %p228 = por %p226, %p227
      %p230 = scmp.ne.s32.totalorder %s215, %s229
      %p231 = scmp.eq.s32.totalorder %s32, 0
      %p232 = por %p230, %p231
      %s234 = sadd.s32 %s233, 1
      %p237 = scmp.eq.s32.totalorder %s26, 1
      %p238 = scmp.ne.s32.totalorder %s233, %s235
      %p239 = scmp.eq.s32.totalorder %s26, 0
      %p240 = por %p238, %p239
      %p241 = scmp.ne.s32.totalorder %s233, %s235
      %p242 = scmp.eq.s32.totalorder %s31, 1
      %p243 = por %p241, %p242
      %p244 = scmp.ne.s32.totalorder %s235, %s236
      %p245 = scmp.eq.s32.totalorder %s31, 0
      %p246 = por %p244, %p245
      %p247 = scmp.ne.s32.totalorder %s235, %s236
      %p248 = scmp.eq.s32.totalorder %s32, 1
      %p249 = por %p247, %p248
      %p251 = scmp.ne.s32.totalorder %s236, %s250
      %p252 = scmp.eq.s32.totalorder %s32, 0
      %p253 = por %p251, %p252
      %s254 = ssub.s32 %s26, %s33
      %p255 = scmp.eq.s32.totalorder %s254, 0
      %s257 = sadd.s32 %s256, 1
      %s258 = scalar_select %p255, %s256, %s257
      %p261 = pneg %p255
      %p262 = scmp.eq.s32.totalorder %s26, 1
      %p263 = por %p261, %p262
      %p264 = scmp.ne.s32.totalorder %s256, %s259
      %p265 = scmp.eq.s32.totalorder %s26, 0
      %p266 = por %p264, %p265
      %p267 = scmp.ne.s32.totalorder %s256, %s259
      %p268 = scmp.eq.s32.totalorder %s31, 1
      %p269 = por %p267, %p268
      %p270 = scmp.ne.s32.totalorder %s259, %s260
      %p271 = scmp.eq.s32.totalorder %s31, 0
      %p272 = por %p270, %p271
      %p273 = scmp.ne.s32.totalorder %s259, %s260
      %p274 = scmp.eq.s32.totalorder %s32, 1
      %p275 = por %p273, %p274
      %p277 = scmp.ne.s32.totalorder %s260, %s276
      %p278 = scmp.eq.s32.totalorder %s32, 0
      %p279 = por %p277, %p278
      %p280 = scmp.le.s32.totalorder 1, %s26
      %p281 = scmp.lt.s32.totalorder %s26, 3
      %p282 = pnand %p280, %p281
      %p283 = pneg %p282
      // Predicated region
      $region9: #{tpu_custom_call.1} parent=5 // pred_check
        _
      $region10: #{tpu_custom_call.1} parent=5 // pred_check_branch
        %285 = sbr.rel (%p282) target = $region12
      $region11: #{tpu_custom_call.1} parent=5 // pred_region
        %s286 = ssub.s32 %s26, 1
        // Predicated region
        $region13: #{tpu_custom_call.1} parent=11 // pred_check
          %p287 = pneg %p99
        $region14: #{tpu_custom_call.1} parent=11 // pred_check_branch
          %289 = sbr.rel (%p287) target = $region16
        $region15: #{tpu_custom_call.1} parent=11 // pred_region
          _
        $region16: #{tpu_custom_call.1} parent=11 // pred_fallthru
          _
        // Predicated region
        $region17: #{tpu_custom_call.1} parent=11 // pred_check
          %p290 = pneg %p120
        $region18: #{tpu_custom_call.1} parent=11 // pred_check_branch
          %292 = sbr.rel (%p290) target = $region20
        $region19: #{tpu_custom_call.1} parent=11 // pred_region
          _
        $region20: #{tpu_custom_call.1} parent=11 // pred_fallthru
          _
        // Predicated region
        $region21: #{tpu_custom_call.1} parent=11 // pred_check
          %p293 = pneg %p141
        $region22: #{tpu_custom_call.1} parent=11 // pred_check_branch
          %295 = sbr.rel (%p293) target = $region24
        $region23: #{tpu_custom_call.1} parent=11 // pred_region
          _
        $region24: #{tpu_custom_call.1} parent=11 // pred_fallthru
          _
        // Predicated region
        $region25: #{tpu_custom_call.1} parent=11 // pred_check
          %p296 = pneg %p162
        $region26: #{tpu_custom_call.1} parent=11 // pred_check_branch
          %298 = sbr.rel (%p296) target = $region28
        $region27: #{tpu_custom_call.1} parent=11 // pred_region
          _
        $region28: #{tpu_custom_call.1} parent=11 // pred_fallthru
          _
        // Predicated region
        $region29: #{tpu_custom_call.1} parent=11 // pred_check
          %p299 = pneg %p183
        $region30: #{tpu_custom_call.1} parent=11 // pred_check_branch
          %301 = sbr.rel (%p299) target = $region32
        $region31: #{tpu_custom_call.1} parent=11 // pred_region
          _
        $region32: #{tpu_custom_call.1} parent=11 // pred_fallthru
          _
        // Predicated region
        $region33: #{tpu_custom_call.1} parent=11 // pred_check
          %p302 = pneg %p204
        $region34: #{tpu_custom_call.1} parent=11 // pred_check_branch
          %304 = sbr.rel (%p302) target = $region36
        $region35: #{tpu_custom_call.1} parent=11 // pred_region
          _
        $region36: #{tpu_custom_call.1} parent=11 // pred_fallthru
          _
        // Predicated region
        $region37: #{tpu_custom_call.1} parent=11 // pred_check
          %p305 = pneg %p225
        $region38: #{tpu_custom_call.1} parent=11 // pred_check_branch
          %307 = sbr.rel (%p305) target = $region40
        $region39: #{tpu_custom_call.1} parent=11 // pred_region
          _
        $region40: #{tpu_custom_call.1} parent=11 // pred_fallthru
          _
        // Predicated region
        $region41: #{tpu_custom_call.1} parent=11 // pred_check
          %p308 = pneg %p246
        $region42: #{tpu_custom_call.1} parent=11 // pred_check_branch
          %310 = sbr.rel (%p308) target = $region44
        $region43: #{tpu_custom_call.1} parent=11 // pred_region
          _
        $region44: #{tpu_custom_call.1} parent=11 // pred_fallthru
          _
      $region12: #{tpu_custom_call.1} parent=5 // pred_fallthru
        _
      %p311 = scmp.lt.s32.totalorder %s26, 2
      // Predicated region
      $region45: #{tpu_custom_call.1} parent=5 // pred_check
        %p312 = pneg %p311
      $region46: #{tpu_custom_call.1} parent=5 // pred_check_branch
        %314 = sbr.rel (%p312) target = $region48
      $region47: #{tpu_custom_call.1} parent=5 // pred_region
        // Predicated region
        $region49: #{tpu_custom_call.1} parent=47 // pred_check
          %p315 = pneg %p46
        $region50: #{tpu_custom_call.1} parent=47 // pred_check_branch
          %317 = sbr.rel (%p315) target = $region52
        $region51: #{tpu_custom_call.1} parent=47 // pred_region
          %s318 = sand.u32 %s36, 1
          %s319 = scalar_lea.sflag [#allocation4], %s318
          %s320 = sand.u32 %s36, 1
          %s321 = smul.addr %s320, 4
          %s322 = scalar_lea.vmem [#allocation3], %s321
          %s323 = smul.u32 4, %s26
          %325 = vsyncadd %s319, 0
          %s326 = scalar_lea.hbm %s0, %s323
          %s328 = sshll.u32 %s326, 4
          %s329 = int_to_ptr.hbm [resolvable:$true] %s328
          %s330 = sshll.u32 %s322, 4
          %s331 = int_to_ptr.vmem [resolvable:$true] %s330
          %333 = dma.hbm_to_vmem [thread:$0]  %s329, 64, %s331, %s319
        $region52: #{tpu_custom_call.1} parent=47 // pred_fallthru
          _
        // Predicated region
        $region53: #{tpu_custom_call.1} parent=47 // pred_check
          %p334 = pneg %p72
        $region54: #{tpu_custom_call.1} parent=47 // pred_check_branch
          %336 = sbr.rel (%p334) target = $region56
        $region55: #{tpu_custom_call.1} parent=47 // pred_region
          %s337 = sand.u32 %s62, 1
          %s338 = scalar_lea.sflag [#allocation7], %s337
          %s339 = sand.u32 %s62, 1
          %s340 = smul.addr %s339, 4
          %s341 = scalar_lea.vmem [#allocation6], %s340
          %s342 = smul.u32 4, %s26
          %344 = vsyncadd %s338, 0
          %s345 = scalar_lea.hbm %s1, %s342
          %s347 = sshll.u32 %s345, 4
          %s348 = int_to_ptr.hbm [resolvable:$true] %s347
          %s349 = sshll.u32 %s341, 4
          %s350 = int_to_ptr.vmem [resolvable:$true] %s349
          %352 = dma.hbm_to_vmem [thread:$0]  %s348, 64, %s350, %s338
        $region56: #{tpu_custom_call.1} parent=47 // pred_fallthru
          _
      $region48: #{tpu_custom_call.1} parent=5 // pred_fallthru
        _
      %p353 = scmp.le.s32.totalorder 1, %s26
      %p354 = scmp.lt.s32.totalorder %s26, 3
      %p355 = pnand %p353, %p354
      %p356 = pneg %p355
      // Predicated region
      $region57: #{tpu_custom_call.1} parent=5 // pred_check
        _
      $region58: #{tpu_custom_call.1} parent=5 // pred_check_branch
        %358 = sbr.rel (%p355) target = $region60
      $region59: #{tpu_custom_call.1} parent=5 // pred_region
        %s359 = ssub.s32 %s26, 1
        %s360 = sand.u32 %s39, 1
        %s361 = scalar_lea.sflag [#allocation4], %s360
        %s362 = sand.u32 %s39, 1
        %s363 = smul.addr %s362, 4
        %s364 = scalar_lea.vmem [#allocation3], %s363
        // Predicated region
        $region61: #{tpu_custom_call.1} parent=59 // pred_check
          %p365 = pneg %p52
        $region62: #{tpu_custom_call.1} parent=59 // pred_check_branch
          %367 = sbr.rel (%p365) target = $region64
        $region63: #{tpu_custom_call.1} parent=59 // pred_region
          %369 = dma.done %s361, 64
        $region64: #{tpu_custom_call.1} parent=59 // pred_fallthru
          _
        %s370 = sand.u32 %s65, 1
        %s371 = scalar_lea.sflag [#allocation7], %s370
        %s372 = sand.u32 %s65, 1
        %s373 = smul.addr %s372, 4
        %s374 = scalar_lea.vmem [#allocation6], %s373
        // Predicated region
        $region65: #{tpu_custom_call.1} parent=59 // pred_check
          %p375 = pneg %p78
        $region66: #{tpu_custom_call.1} parent=59 // pred_check_branch
          %377 = sbr.rel (%p375) target = $region68
        $region67: #{tpu_custom_call.1} parent=59 // pred_region
          %379 = dma.done %s371, 64
        $region68: #{tpu_custom_call.1} parent=59 // pred_fallthru
          _
        %s380 = sand.u32 %s39, 1
        %s381 = scalar_lea.sflag [#allocation4], %s380
        %s382 = sand.u32 %s39, 1
        %s383 = smul.addr %s382, 4
        %s384 = scalar_lea.vmem [#allocation3], %s383
        %p385 = pneg %p52
        %p386 = pneg %p49
        %s387 = sand.u32 %s65, 1
        %s388 = scalar_lea.sflag [#allocation7], %s387
        %s389 = sand.u32 %s65, 1
        %s390 = smul.addr %s389, 4
        %s391 = scalar_lea.vmem [#allocation6], %s390
        %p392 = pneg %p78
        %p393 = pneg %p75
        %p394 = pneg %p99
        %p395 = pneg %p96
        %p396 = pneg %p120
        %p397 = pneg %p117
        %p398 = pneg %p141
        %p399 = pneg %p138
        %p400 = pneg %p162
        %p401 = pneg %p159
        %p402 = pneg %p183
        %p403 = pneg %p180
        %p404 = pneg %p204
        %p405 = pneg %p201
        %p406 = pneg %p225
        %p407 = pneg %p222
        %p408 = pneg %p246
        %p409 = pneg %p243
        %p410 = pneg %p272
        %p411 = pneg %p269
        %s412 = sand.u32 %s259, 1
        %s413 = scalar_lea.sflag [#allocation5], %s412
        %s414 = sand.u32 %s259, 1
        %s415 = smul.addr %s414, 4
        %s416 = scalar_lea.vmem [#allocation8], %s415
        %s417 = smul.u32 4, %s31
        %s418 = smul.u32 4, %s31
        %s419 = smul.u32 4, %s31
        %v420 = vld [vmem:[%s2] sm:$0xff]
        %v421 = vld [vmem:[%s2 + $0x8] sm:$0xff]
        %v422 = vld [vmem:[%s2 + $0x10] sm:$0xff]
        %v423 = vld [vmem:[%s2 + $0x18] sm:$0xff]
        %v424 = vld [vmem:[%s364] sm:$0xf]
        %426 = vset.pattern.permute.xlu0 0
        %427 = vperm.xlu0 %426, %v420
        %v428 = vpop.permute.xlu0 %427
        %431 = vset.pattern.permute.xlu0 0
        %432 = vperm.xlu0 %431, %v421
        %v433 = vpop.permute.xlu0 %432
        %436 = vset.pattern.permute.xlu0 0
        %437 = vperm.xlu0 %436, %v422
        %v438 = vpop.permute.xlu0 %437
        %441 = vset.pattern.permute.xlu0 0
        %442 = vperm.xlu0 %441, %v423
        %v443 = vpop.permute.xlu0 %442
        %v446 = vperm.slane %v424, 0
        %v447 = vperm.slane %v424, 1
        %v448 = vperm.slane %v424, 2
        %v449 = vperm.slane %v424, 3
        %v454 = vmul.f32 %v428, %v446
        %v455 = vmul.f32 %v428, %v447
        %v456 = vmul.f32 %v428, %v448
        %v457 = vmul.f32 %v428, %v449
        %v458 = vmul.f32 %v433, %v446
        %v459 = vmul.f32 %v433, %v447
        %v460 = vmul.f32 %v433, %v448
        %v461 = vmul.f32 %v433, %v449
        %v462 = vmul.f32 %v438, %v446
        %v463 = vmul.f32 %v438, %v447
        %v464 = vmul.f32 %v438, %v448
        %v465 = vmul.f32 %v438, %v449
        %v466 = vmul.f32 %v443, %v446
        %v467 = vmul.f32 %v443, %v447
        %v468 = vmul.f32 %v443, %v448
        %v469 = vmul.f32 %v443, %v449
        %v470 = vld [vmem:[%s3] sm:$0xff]
        %v471 = vld [vmem:[%s3 + $0x8] sm:$0xff]
        %v472 = vld [vmem:[%s3 + $0x10] sm:$0xff]
        %v473 = vld [vmem:[%s3 + $0x18] sm:$0xff]
        %v474 = vld [vmem:[%s374] sm:$0xf]
        %476 = vset.pattern.permute.xlu0 0
        %477 = vperm.xlu0 %476, %v470
        %v478 = vpop.permute.xlu0 %477
        %481 = vset.pattern.permute.xlu0 0
        %482 = vperm.xlu0 %481, %v471
        %v483 = vpop.permute.xlu0 %482
        %486 = vset.pattern.permute.xlu0 0
        %487 = vperm.xlu0 %486, %v472
        %v488 = vpop.permute.xlu0 %487
        %491 = vset.pattern.permute.xlu0 0
        %492 = vperm.xlu0 %491, %v473
        %v493 = vpop.permute.xlu0 %492
        %v496 = vperm.slane %v474, 0
        %v497 = vperm.slane %v474, 1
        %v498 = vperm.slane %v474, 2
        %v499 = vperm.slane %v474, 3
        %v504 = vmul.f32 %v478, %v496
        %v505 = vmul.f32 %v478, %v497
        %v506 = vmul.f32 %v478, %v498
        %v507 = vmul.f32 %v478, %v499
        %v508 = vmul.f32 %v483, %v496
        %v509 = vmul.f32 %v483, %v497
        %v510 = vmul.f32 %v483, %v498
        %v511 = vmul.f32 %v483, %v499
        %v512 = vmul.f32 %v488, %v496
        %v513 = vmul.f32 %v488, %v497
        %v514 = vmul.f32 %v488, %v498
        %v515 = vmul.f32 %v488, %v499
        %v516 = vmul.f32 %v493, %v496
        %v517 = vmul.f32 %v493, %v497
        %v518 = vmul.f32 %v493, %v498
        %v519 = vmul.f32 %v493, %v499
        %v520 = vadd.f32 %v454, %v504
        %v521 = vadd.f32 %v455, %v505
        %v522 = vadd.f32 %v456, %v506
        %v523 = vadd.f32 %v457, %v507
        %v524 = vadd.f32 %v458, %v508
        %v525 = vadd.f32 %v459, %v509
        %v526 = vadd.f32 %v460, %v510
        %v527 = vadd.f32 %v461, %v511
        %v528 = vadd.f32 %v462, %v512
        %v529 = vadd.f32 %v463, %v513
        %v530 = vadd.f32 %v464, %v514
        %v531 = vadd.f32 %v465, %v515
        %v532 = vadd.f32 %v466, %v516
        %v533 = vadd.f32 %v467, %v517
        %v534 = vadd.f32 %v468, %v518
        %v535 = vadd.f32 %v469, %v519
        %v536 = vld [vmem:[%s4] sm:$0xff]
        %v537 = vld [vmem:[%s4 + $0x8] sm:$0xff]
        %v538 = vld [vmem:[%s4 + $0x10] sm:$0xff]
        %v539 = vld [vmem:[%s4 + $0x18] sm:$0xff]
        %541 = vset.pattern.permute.xlu0 0
        %542 = vperm.xlu0 %541, %v536
        %v543 = vpop.permute.xlu0 %542
        %546 = vset.pattern.permute.xlu0 0
        %547 = vperm.xlu0 %546, %v537
        %v548 = vpop.permute.xlu0 %547
        %551 = vset.pattern.permute.xlu0 0
        %552 = vperm.xlu0 %551, %v538
        %v553 = vpop.permute.xlu0 %552
        %556 = vset.pattern.permute.xlu0 0
        %557 = vperm.xlu0 %556, %v539
        %v558 = vpop.permute.xlu0 %557
        %v560 = vadd.f32 %v520, %v543
        %v561 = vadd.f32 %v521, %v543
        %v562 = vadd.f32 %v522, %v543
        %v563 = vadd.f32 %v523, %v543
        %v564 = vadd.f32 %v524, %v548
        %v565 = vadd.f32 %v525, %v548
        %v566 = vadd.f32 %v526, %v548
        %v567 = vadd.f32 %v527, %v548
        %v568 = vadd.f32 %v528, %v553
        %v569 = vadd.f32 %v529, %v553
        %v570 = vadd.f32 %v530, %v553
        %v571 = vadd.f32 %v531, %v553
        %v572 = vadd.f32 %v532, %v558
        %v573 = vadd.f32 %v533, %v558
        %v574 = vadd.f32 %v534, %v558
        %v575 = vadd.f32 %v535, %v558
        %v576 = vtanh.pop %v560
        %v577 = vtanh.pop %v561
        %v578 = vtanh.pop %v562
        %v579 = vtanh.pop %v563
        %v580 = vtanh.pop %v564
        %v581 = vtanh.pop %v565
        %v582 = vtanh.pop %v566
        %v583 = vtanh.pop %v567
        %v584 = vtanh.pop %v568
        %v585 = vtanh.pop %v569
        %v586 = vtanh.pop %v570
        %v587 = vtanh.pop %v571
        %v588 = vtanh.pop %v572
        %v589 = vtanh.pop %v573
        %v590 = vtanh.pop %v574
        %v591 = vtanh.pop %v575
        %v592 = vld [vmem:[%s5] sm:$0xff]
        %v593 = vld [vmem:[%s5 + $0x8] sm:$0xff]
        %v594 = vld [vmem:[%s5 + $0x10] sm:$0xff]
        %v595 = vld [vmem:[%s5 + $0x18] sm:$0xff]
        %vm596 = vcmask 261120
        %v598 = vsel %vm596, %v592, 0
        %v601 = vsel %vm596, %v593, 0
        %v604 = vsel %vm596, %v594, 0
        %v607 = vsel %vm596, %v595, 0
        %609 = vmatpush.msra.mxu0 0.0
        %610 = vmatpush.msra.mxu0 0.0
        %611 = vmatpush.msra.mxu0 0.0
        %612 = vmatpush.msra.mxu0 0.0
        %613 = vmatpush.msra.mxu0 0.0
        %614 = vmatpush.msra.mxu0 0.0
        %615 = vmatpush.msra.mxu0 0.0
        %616 = vmatpush.msra.mxu0 0.0
        %617 = vmatpush.msra.mxu0 0.0
        %618 = vmatpush.msra.mxu0 0.0
        %619 = vmatpush.msra.mxu0 0.0
        %620 = vmatpush.msra.mxu0 0.0
        %621 = vmatpush.msra.mxu0 %v588
        %622 = vmatpush.msra.mxu0 %v584
        %623 = vmatpush.msra.mxu0 %v580
        %624 = vmatpush.msra.mxu0 %v576
        %625 = vmatmul.f32.gmra.mxu0 %v598
        %v626 = vpop.f32.mrf.mxu0
        %v627 = vadd.f32 0.0, %v626
        %628 = vmatmul.f32.gmra.mxu0 %v601
        %v629 = vpop.f32.mrf.mxu0
        %v630 = vadd.f32 0.0, %v629
        %631 = vmatmul.f32.gmra.mxu0 %v604
        %v632 = vpop.f32.mrf.mxu0
        %v633 = vadd.f32 0.0, %v632
        %634 = vmatmul.f32.gmra.mxu0 %v607
        %v635 = vpop.f32.mrf.mxu0
        %v636 = vadd.f32 0.0, %v635
        %637 = vdwg.mxu0
        %638 = vmatpush.msra.mxu0 0.0
        %639 = vmatpush.msra.mxu0 0.0
        %640 = vmatpush.msra.mxu0 0.0
        %641 = vmatpush.msra.mxu0 0.0
        %642 = vmatpush.msra.mxu0 0.0
        %643 = vmatpush.msra.mxu0 0.0
        %644 = vmatpush.msra.mxu0 0.0
        %645 = vmatpush.msra.mxu0 0.0
        %646 = vmatpush.msra.mxu0 0.0
        %647 = vmatpush.msra.mxu0 0.0
        %648 = vmatpush.msra.mxu0 0.0
        %649 = vmatpush.msra.mxu0 0.0
        %650 = vmatpush.msra.mxu0 %v589
        %651 = vmatpush.msra.mxu0 %v585
        %652 = vmatpush.msra.mxu0 %v581
        %653 = vmatpush.msra.mxu0 %v577
        %654 = vmatmul.f32.gmra.mxu0 %v598
        %v655 = vpop.f32.mrf.mxu0
        %v656 = vadd.f32 0.0, %v655
        %657 = vmatmul.f32.gmra.mxu0 %v601
        %v658 = vpop.f32.mrf.mxu0
        %v659 = vadd.f32 0.0, %v658
        %660 = vmatmul.f32.gmra.mxu0 %v604
        %v661 = vpop.f32.mrf.mxu0
        %v662 = vadd.f32 0.0, %v661
        %663 = vmatmul.f32.gmra.mxu0 %v607
        %v664 = vpop.f32.mrf.mxu0
        %v665 = vadd.f32 0.0, %v664
        %666 = vdwg.mxu0
        %667 = vmatpush.msra.mxu0 0.0
        %668 = vmatpush.msra.mxu0 0.0
        %669 = vmatpush.msra.mxu0 0.0
        %670 = vmatpush.msra.mxu0 0.0
        %671 = vmatpush.msra.mxu0 0.0
        %672 = vmatpush.msra.mxu0 0.0
        %673 = vmatpush.msra.mxu0 0.0
        %674 = vmatpush.msra.mxu0 0.0
        %675 = vmatpush.msra.mxu0 0.0
        %676 = vmatpush.msra.mxu0 0.0
        %677 = vmatpush.msra.mxu0 0.0
        %678 = vmatpush.msra.mxu0 0.0
        %679 = vmatpush.msra.mxu0 %v590
        %680 = vmatpush.msra.mxu0 %v586
        %681 = vmatpush.msra.mxu0 %v582
        %682 = vmatpush.msra.mxu0 %v578
        %683 = vmatmul.f32.gmra.mxu0 %v598
        %v684 = vpop.f32.mrf.mxu0
        %v685 = vadd.f32 0.0, %v684
        %686 = vmatmul.f32.gmra.mxu0 %v601
        %v687 = vpop.f32.mrf.mxu0
        %v688 = vadd.f32 0.0, %v687
        %689 = vmatmul.f32.gmra.mxu0 %v604
        %v690 = vpop.f32.mrf.mxu0
        %v691 = vadd.f32 0.0, %v690
        %692 = vmatmul.f32.gmra.mxu0 %v607
        %v693 = vpop.f32.mrf.mxu0
        %v694 = vadd.f32 0.0, %v693
        %695 = vdwg.mxu0
        %696 = vmatpush.msra.mxu0 0.0
        %697 = vmatpush.msra.mxu0 0.0
        %698 = vmatpush.msra.mxu0 0.0
        %699 = vmatpush.msra.mxu0 0.0
        %700 = vmatpush.msra.mxu0 0.0
        %701 = vmatpush.msra.mxu0 0.0
        %702 = vmatpush.msra.mxu0 0.0
        %703 = vmatpush.msra.mxu0 0.0
        %704 = vmatpush.msra.mxu0 0.0
        %705 = vmatpush.msra.mxu0 0.0
        %706 = vmatpush.msra.mxu0 0.0
        %707 = vmatpush.msra.mxu0 0.0
        %708 = vmatpush.msra.mxu0 %v591
        %709 = vmatpush.msra.mxu0 %v587
        %710 = vmatpush.msra.mxu0 %v583
        %711 = vmatpush.msra.mxu0 %v579
        %712 = vmatmul.f32.gmra.mxu0 %v598
        %v713 = vpop.f32.mrf.mxu0
        %v714 = vadd.f32 0.0, %v713
        %715 = vmatmul.f32.gmra.mxu0 %v601
        %v716 = vpop.f32.mrf.mxu0
        %v717 = vadd.f32 0.0, %v716
        %718 = vmatmul.f32.gmra.mxu0 %v604
        %v719 = vpop.f32.mrf.mxu0
        %v720 = vadd.f32 0.0, %v719
        %721 = vmatmul.f32.gmra.mxu0 %v607
        %v722 = vpop.f32.mrf.mxu0
        %v723 = vadd.f32 0.0, %v722
        %724 = vdwg.mxu0
        %v725 = vtanh.pop %v627
        %v726 = vtanh.pop %v656
        %v727 = vtanh.pop %v685
        %v728 = vtanh.pop %v714
        %v729 = vtanh.pop %v630
        %v730 = vtanh.pop %v659
        %v731 = vtanh.pop %v688
        %v732 = vtanh.pop %v717
        %v733 = vtanh.pop %v633
        %v734 = vtanh.pop %v662
        %v735 = vtanh.pop %v691
        %v736 = vtanh.pop %v720
        %v737 = vtanh.pop %v636
        %v738 = vtanh.pop %v665
        %v739 = vtanh.pop %v694
        %v740 = vtanh.pop %v723
        %v741 = vld [vmem:[%s6] sm:$0xff]
        %v742 = vld [vmem:[%s6 + $0x8] sm:$0xff]
        %v743 = vld [vmem:[%s6 + $0x10] sm:$0xff]
        %v744 = vld [vmem:[%s6 + $0x18] sm:$0xff]
        %v746 = vsel %vm596, %v741, 0
        %v749 = vsel %vm596, %v742, 0
        %v752 = vsel %vm596, %v743, 0
        %v755 = vsel %vm596, %v744, 0
        %757 = vmatpush.msra.mxu0 0.0
        %758 = vmatpush.msra.mxu0 0.0
        %759 = vmatpush.msra.mxu0 0.0
        %760 = vmatpush.msra.mxu0 0.0
        %761 = vmatpush.msra.mxu0 0.0
        %762 = vmatpush.msra.mxu0 0.0
        %763 = vmatpush.msra.mxu0 0.0
        %764 = vmatpush.msra.mxu0 0.0
        %765 = vmatpush.msra.mxu0 0.0
        %766 = vmatpush.msra.mxu0 0.0
        %767 = vmatpush.msra.mxu0 0.0
        %768 = vmatpush.msra.mxu0 0.0
        %769 = vmatpush.msra.mxu0 %v737
        %770 = vmatpush.msra.mxu0 %v733
        %771 = vmatpush.msra.mxu0 %v729
        %772 = vmatpush.msra.mxu0 %v725
        %773 = vmatmul.f32.gmra.mxu0 %v746
        %v774 = vpop.f32.mrf.mxu0
        %v775 = vadd.f32 0.0, %v774
        %776 = vmatmul.f32.gmra.mxu0 %v749
        %v777 = vpop.f32.mrf.mxu0
        %v778 = vadd.f32 0.0, %v777
        %779 = vmatmul.f32.gmra.mxu0 %v752
        %v780 = vpop.f32.mrf.mxu0
        %v781 = vadd.f32 0.0, %v780
        %782 = vmatmul.f32.gmra.mxu0 %v755
        %v783 = vpop.f32.mrf.mxu0
        %v784 = vadd.f32 0.0, %v783
        %785 = vdwg.mxu0
        %786 = vmatpush.msra.mxu0 0.0
        %787 = vmatpush.msra.mxu0 0.0
        %788 = vmatpush.msra.mxu0 0.0
        %789 = vmatpush.msra.mxu0 0.0
        %790 = vmatpush.msra.mxu0 0.0
        %791 = vmatpush.msra.mxu0 0.0
        %792 = vmatpush.msra.mxu0 0.0
        %793 = vmatpush.msra.mxu0 0.0
        %794 = vmatpush.msra.mxu0 0.0
        %795 = vmatpush.msra.mxu0 0.0
        %796 = vmatpush.msra.mxu0 0.0
        %797 = vmatpush.msra.mxu0 0.0
        %798 = vmatpush.msra.mxu0 %v738
        %799 = vmatpush.msra.mxu0 %v734
        %800 = vmatpush.msra.mxu0 %v730
        %801 = vmatpush.msra.mxu0 %v726
        %802 = vmatmul.f32.gmra.mxu0 %v746
        %v803 = vpop.f32.mrf.mxu0
        %v804 = vadd.f32 0.0, %v803
        %805 = vmatmul.f32.gmra.mxu0 %v749
        %v806 = vpop.f32.mrf.mxu0
        %v807 = vadd.f32 0.0, %v806
        %808 = vmatmul.f32.gmra.mxu0 %v752
        %v809 = vpop.f32.mrf.mxu0
        %v810 = vadd.f32 0.0, %v809
        %811 = vmatmul.f32.gmra.mxu0 %v755
        %v812 = vpop.f32.mrf.mxu0
        %v813 = vadd.f32 0.0, %v812
        %814 = vdwg.mxu0
        %815 = vmatpush.msra.mxu0 0.0
        %816 = vmatpush.msra.mxu0 0.0
        %817 = vmatpush.msra.mxu0 0.0
        %818 = vmatpush.msra.mxu0 0.0
        %819 = vmatpush.msra.mxu0 0.0
        %820 = vmatpush.msra.mxu0 0.0
        %821 = vmatpush.msra.mxu0 0.0
        %822 = vmatpush.msra.mxu0 0.0
        %823 = vmatpush.msra.mxu0 0.0
        %824 = vmatpush.msra.mxu0 0.0
        %825 = vmatpush.msra.mxu0 0.0
        %826 = vmatpush.msra.mxu0 0.0
        %827 = vmatpush.msra.mxu0 %v739
        %828 = vmatpush.msra.mxu0 %v735
        %829 = vmatpush.msra.mxu0 %v731
        %830 = vmatpush.msra.mxu0 %v727
        %831 = vmatmul.f32.gmra.mxu0 %v746
        %v832 = vpop.f32.mrf.mxu0
        %v833 = vadd.f32 0.0, %v832
        %834 = vmatmul.f32.gmra.mxu0 %v749
        %v835 = vpop.f32.mrf.mxu0
        %v836 = vadd.f32 0.0, %v835
        %837 = vmatmul.f32.gmra.mxu0 %v752
        %v838 = vpop.f32.mrf.mxu0
        %v839 = vadd.f32 0.0, %v838
        %840 = vmatmul.f32.gmra.mxu0 %v755
        %v841 = vpop.f32.mrf.mxu0
        %v842 = vadd.f32 0.0, %v841
        %843 = vdwg.mxu0
        %844 = vmatpush.msra.mxu0 0.0
        %845 = vmatpush.msra.mxu0 0.0
        %846 = vmatpush.msra.mxu0 0.0
        %847 = vmatpush.msra.mxu0 0.0
        %848 = vmatpush.msra.mxu0 0.0
        %849 = vmatpush.msra.mxu0 0.0
        %850 = vmatpush.msra.mxu0 0.0
        %851 = vmatpush.msra.mxu0 0.0
        %852 = vmatpush.msra.mxu0 0.0
        %853 = vmatpush.msra.mxu0 0.0
        %854 = vmatpush.msra.mxu0 0.0
        %855 = vmatpush.msra.mxu0 0.0
        %856 = vmatpush.msra.mxu0 %v740
        %857 = vmatpush.msra.mxu0 %v736
        %858 = vmatpush.msra.mxu0 %v732
        %859 = vmatpush.msra.mxu0 %v728
        %860 = vmatmul.f32.gmra.mxu0 %v746
        %v861 = vpop.f32.mrf.mxu0
        %v862 = vadd.f32 0.0, %v861
        %863 = vmatmul.f32.gmra.mxu0 %v749
        %v864 = vpop.f32.mrf.mxu0
        %v865 = vadd.f32 0.0, %v864
        %866 = vmatmul.f32.gmra.mxu0 %v752
        %v867 = vpop.f32.mrf.mxu0
        %v868 = vadd.f32 0.0, %v867
        %869 = vmatmul.f32.gmra.mxu0 %v755
        %v870 = vpop.f32.mrf.mxu0
        %v871 = vadd.f32 0.0, %v870
        %872 = vdwg.mxu0
        %v873 = vtanh.pop %v775
        %v874 = vtanh.pop %v804
        %v875 = vtanh.pop %v833
        %v876 = vtanh.pop %v862
        %v877 = vtanh.pop %v778
        %v878 = vtanh.pop %v807
        %v879 = vtanh.pop %v836
        %v880 = vtanh.pop %v865
        %v881 = vtanh.pop %v781
        %v882 = vtanh.pop %v810
        %v883 = vtanh.pop %v839
        %v884 = vtanh.pop %v868
        %v885 = vtanh.pop %v784
        %v886 = vtanh.pop %v813
        %v887 = vtanh.pop %v842
        %v888 = vtanh.pop %v871
        %v889 = vld [vmem:[%s7] sm:$0xff]
        %v890 = vld [vmem:[%s7 + $0x8] sm:$0xff]
        %v891 = vld [vmem:[%s7 + $0x10] sm:$0xff]
        %v892 = vld [vmem:[%s7 + $0x18] sm:$0xff]
        %v894 = vsel %vm596, %v889, 0
        %v897 = vsel %vm596, %v890, 0
        %v900 = vsel %vm596, %v891, 0
        %v903 = vsel %vm596, %v892, 0
        %905 = vmatpush.msra.mxu0 0.0
        %906 = vmatpush.msra.mxu0 0.0
        %907 = vmatpush.msra.mxu0 0.0
        %908 = vmatpush.msra.mxu0 0.0
        %909 = vmatpush.msra.mxu0 0.0
        %910 = vmatpush.msra.mxu0 0.0
        %911 = vmatpush.msra.mxu0 0.0
        %912 = vmatpush.msra.mxu0 0.0
        %913 = vmatpush.msra.mxu0 0.0
        %914 = vmatpush.msra.mxu0 0.0
        %915 = vmatpush.msra.mxu0 0.0
        %916 = vmatpush.msra.mxu0 0.0
        %917 = vmatpush.msra.mxu0 %v885
        %918 = vmatpush.msra.mxu0 %v881
        %919 = vmatpush.msra.mxu0 %v877
        %920 = vmatpush.msra.mxu0 %v873
        %921 = vmatmul.f32.gmra.mxu0 %v894
        %v922 = vpop.f32.mrf.mxu0
        %v923 = vadd.f32 0.0, %v922
        %924 = vmatmul.f32.gmra.mxu0 %v897
        %v925 = vpop.f32.mrf.mxu0
        %v926 = vadd.f32 0.0, %v925
        %927 = vmatmul.f32.gmra.mxu0 %v900
        %v928 = vpop.f32.mrf.mxu0
        %v929 = vadd.f32 0.0, %v928
        %930 = vmatmul.f32.gmra.mxu0 %v903
        %v931 = vpop.f32.mrf.mxu0
        %v932 = vadd.f32 0.0, %v931
        %933 = vdwg.mxu0
        %934 = vmatpush.msra.mxu0 0.0
        %935 = vmatpush.msra.mxu0 0.0
        %936 = vmatpush.msra.mxu0 0.0
        %937 = vmatpush.msra.mxu0 0.0
        %938 = vmatpush.msra.mxu0 0.0
        %939 = vmatpush.msra.mxu0 0.0
        %940 = vmatpush.msra.mxu0 0.0
        %941 = vmatpush.msra.mxu0 0.0
        %942 = vmatpush.msra.mxu0 0.0
        %943 = vmatpush.msra.mxu0 0.0
        %944 = vmatpush.msra.mxu0 0.0
        %945 = vmatpush.msra.mxu0 0.0
        %946 = vmatpush.msra.mxu0 %v886
        %947 = vmatpush.msra.mxu0 %v882
        %948 = vmatpush.msra.mxu0 %v878
        %949 = vmatpush.msra.mxu0 %v874
        %950 = vmatmul.f32.gmra.mxu0 %v894
        %v951 = vpop.f32.mrf.mxu0
        %v952 = vadd.f32 0.0, %v951
        %953 = vmatmul.f32.gmra.mxu0 %v897
        %v954 = vpop.f32.mrf.mxu0
        %v955 = vadd.f32 0.0, %v954
        %956 = vmatmul.f32.gmra.mxu0 %v900
        %v957 = vpop.f32.mrf.mxu0
        %v958 = vadd.f32 0.0, %v957
        %959 = vmatmul.f32.gmra.mxu0 %v903
        %v960 = vpop.f32.mrf.mxu0
        %v961 = vadd.f32 0.0, %v960
        %962 = vdwg.mxu0
        %963 = vmatpush.msra.mxu0 0.0
        %964 = vmatpush.msra.mxu0 0.0
        %965 = vmatpush.msra.mxu0 0.0
        %966 = vmatpush.msra.mxu0 0.0
        %967 = vmatpush.msra.mxu0 0.0
        %968 = vmatpush.msra.mxu0 0.0
        %969 = vmatpush.msra.mxu0 0.0
        %970 = vmatpush.msra.mxu0 0.0
        %971 = vmatpush.msra.mxu0 0.0
        %972 = vmatpush.msra.mxu0 0.0
        %973 = vmatpush.msra.mxu0 0.0
        %974 = vmatpush.msra.mxu0 0.0
        %975 = vmatpush.msra.mxu0 %v887
        %976 = vmatpush.msra.mxu0 %v883
        %977 = vmatpush.msra.mxu0 %v879
        %978 = vmatpush.msra.mxu0 %v875
        %979 = vmatmul.f32.gmra.mxu0 %v894
        %v980 = vpop.f32.mrf.mxu0
        %v981 = vadd.f32 0.0, %v980
        %982 = vmatmul.f32.gmra.mxu0 %v897
        %v983 = vpop.f32.mrf.mxu0
        %v984 = vadd.f32 0.0, %v983
        %985 = vmatmul.f32.gmra.mxu0 %v900
        %v986 = vpop.f32.mrf.mxu0
        %v987 = vadd.f32 0.0, %v986
        %988 = vmatmul.f32.gmra.mxu0 %v903
        %v989 = vpop.f32.mrf.mxu0
        %v990 = vadd.f32 0.0, %v989
        %991 = vdwg.mxu0
        %992 = vmatpush.msra.mxu0 0.0
        %993 = vmatpush.msra.mxu0 0.0
        %994 = vmatpush.msra.mxu0 0.0
        %995 = vmatpush.msra.mxu0 0.0
        %996 = vmatpush.msra.mxu0 0.0
        %997 = vmatpush.msra.mxu0 0.0
        %998 = vmatpush.msra.mxu0 0.0
        %999 = vmatpush.msra.mxu0 0.0
        %1000 = vmatpush.msra.mxu0 0.0
        %1001 = vmatpush.msra.mxu0 0.0
        %1002 = vmatpush.msra.mxu0 0.0
        %1003 = vmatpush.msra.mxu0 0.0
        %1004 = vmatpush.msra.mxu0 %v888
        %1005 = vmatpush.msra.mxu0 %v884
        %1006 = vmatpush.msra.mxu0 %v880
        %1007 = vmatpush.msra.mxu0 %v876
        %1008 = vmatmul.f32.gmra.mxu0 %v894
        %v1009 = vpop.f32.mrf.mxu0
        %v1010 = vadd.f32 0.0, %v1009
        %1011 = vmatmul.f32.gmra.mxu0 %v897
        %v1012 = vpop.f32.mrf.mxu0
        %v1013 = vadd.f32 0.0, %v1012
        %1014 = vmatmul.f32.gmra.mxu0 %v900
        %v1015 = vpop.f32.mrf.mxu0
        %v1016 = vadd.f32 0.0, %v1015
        %1017 = vmatmul.f32.gmra.mxu0 %v903
        %v1018 = vpop.f32.mrf.mxu0
        %v1019 = vadd.f32 0.0, %v1018
        %1020 = vdwg.mxu0
        %v1021 = vtanh.pop %v923
        %v1022 = vtanh.pop %v952
        %v1023 = vtanh.pop %v981
        %v1024 = vtanh.pop %v1010
        %v1025 = vtanh.pop %v926
        %v1026 = vtanh.pop %v955
        %v1027 = vtanh.pop %v984
        %v1028 = vtanh.pop %v1013
        %v1029 = vtanh.pop %v929
        %v1030 = vtanh.pop %v958
        %v1031 = vtanh.pop %v987
        %v1032 = vtanh.pop %v1016
        %v1033 = vtanh.pop %v932
        %v1034 = vtanh.pop %v961
        %v1035 = vtanh.pop %v990
        %v1036 = vtanh.pop %v1019
        %v1037 = vld [vmem:[%s8] sm:$0x1]
        %s1038 = sld [smem:[#allocation2]]
        %v1039 = vstv %s1038
        %v1041 = vsel %vm596, %v1037, 0
        %1043 = vmatpush.msra.mxu0 0.0
        %1044 = vmatpush.msra.mxu0 0.0
        %1045 = vmatpush.msra.mxu0 0.0
        %1046 = vmatpush.msra.mxu0 0.0
        %1047 = vmatpush.msra.mxu0 0.0
        %1048 = vmatpush.msra.mxu0 0.0
        %1049 = vmatpush.msra.mxu0 0.0
        %1050 = vmatpush.msra.mxu0 0.0
        %1051 = vmatpush.msra.mxu0 0.0
        %1052 = vmatpush.msra.mxu0 0.0
        %1053 = vmatpush.msra.mxu0 0.0
        %1054 = vmatpush.msra.mxu0 0.0
        %1055 = vmatpush.msra.mxu0 %v1033
        %1056 = vmatpush.msra.mxu0 %v1029
        %1057 = vmatpush.msra.mxu0 %v1025
        %1058 = vmatpush.msra.mxu0 %v1021
        %1059 = vmatmul.f32.gmra.mxu0 %v1041
        %v1060 = vpop.f32.mrf.mxu0
        %v1061 = vadd.f32 %v1039, %v1060
        %1062 = vdwg.mxu0
        %1063 = vmatpush.msra.mxu0 0.0
        %1064 = vmatpush.msra.mxu0 0.0
        %1065 = vmatpush.msra.mxu0 0.0
        %1066 = vmatpush.msra.mxu0 0.0
        %1067 = vmatpush.msra.mxu0 0.0
        %1068 = vmatpush.msra.mxu0 0.0
        %1069 = vmatpush.msra.mxu0 0.0
        %1070 = vmatpush.msra.mxu0 0.0
        %1071 = vmatpush.msra.mxu0 0.0
        %1072 = vmatpush.msra.mxu0 0.0
        %1073 = vmatpush.msra.mxu0 0.0
        %1074 = vmatpush.msra.mxu0 0.0
        %1075 = vmatpush.msra.mxu0 %v1034
        %1076 = vmatpush.msra.mxu0 %v1030
        %1077 = vmatpush.msra.mxu0 %v1026
        %1078 = vmatpush.msra.mxu0 %v1022
        %1079 = vmatmul.f32.gmra.mxu0 %v1041
        %v1080 = vpop.f32.mrf.mxu0
        %v1081 = vadd.f32 %v1039, %v1080
        %1082 = vdwg.mxu0
        %1083 = vmatpush.msra.mxu0 0.0
        %1084 = vmatpush.msra.mxu0 0.0
        %1085 = vmatpush.msra.mxu0 0.0
        %1086 = vmatpush.msra.mxu0 0.0
        %1087 = vmatpush.msra.mxu0 0.0
        %1088 = vmatpush.msra.mxu0 0.0
        %1089 = vmatpush.msra.mxu0 0.0
        %1090 = vmatpush.msra.mxu0 0.0
        %1091 = vmatpush.msra.mxu0 0.0
        %1092 = vmatpush.msra.mxu0 0.0
        %1093 = vmatpush.msra.mxu0 0.0
        %1094 = vmatpush.msra.mxu0 0.0
        %1095 = vmatpush.msra.mxu0 %v1035
        %1096 = vmatpush.msra.mxu0 %v1031
        %1097 = vmatpush.msra.mxu0 %v1027
        %1098 = vmatpush.msra.mxu0 %v1023
        %1099 = vmatmul.f32.gmra.mxu0 %v1041
        %v1100 = vpop.f32.mrf.mxu0
        %v1101 = vadd.f32 %v1039, %v1100
        %1102 = vdwg.mxu0
        %1103 = vmatpush.msra.mxu0 0.0
        %1104 = vmatpush.msra.mxu0 0.0
        %1105 = vmatpush.msra.mxu0 0.0
        %1106 = vmatpush.msra.mxu0 0.0
        %1107 = vmatpush.msra.mxu0 0.0
        %1108 = vmatpush.msra.mxu0 0.0
        %1109 = vmatpush.msra.mxu0 0.0
        %1110 = vmatpush.msra.mxu0 0.0
        %1111 = vmatpush.msra.mxu0 0.0
        %1112 = vmatpush.msra.mxu0 0.0
        %1113 = vmatpush.msra.mxu0 0.0
        %1114 = vmatpush.msra.mxu0 0.0
        %1115 = vmatpush.msra.mxu0 %v1036
        %1116 = vmatpush.msra.mxu0 %v1032
        %1117 = vmatpush.msra.mxu0 %v1028
        %1118 = vmatpush.msra.mxu0 %v1024
        %1119 = vmatmul.f32.gmra.mxu0 %v1041
        %v1120 = vpop.f32.mrf.mxu0
        %v1121 = vadd.f32 %v1039, %v1120
        %1122 = vdwg.mxu0
        %v1127 = vrot.slane %v1081, 7
        %v1128 = vrot.slane %v1101, 6
        %v1129 = vrot.slane %v1121, 5
        %vm1130 = vcmask 1040384
        %v1131 = vsel %vm1130, %v1061, %v1127
        %vm1132 = vcmask 1042434
        %v1133 = vsel %vm1132, %v1128, %v1129
        %vm1134 = vcmask 1041408
        %v1135 = vsel %vm1134, %v1131, %v1133
        %v1137 = vlaneseq
        %vm1138 = vcmp.ge.s32.totalorder %v1137, 0
        %vm1139 = vcmp.lt.s32.totalorder %v1137, 512
        %vm1140 = vmand %vm1138, %vm1139
        %1141 = vst.msk [vmem:[%s416] sm:$0xf] %vm1140, %v1135
        %s1142 = sand.u32 %s259, 1
        %s1143 = scalar_lea.sflag [#allocation5], %s1142
        %s1144 = sand.u32 %s259, 1
        %s1145 = smul.addr %s1144, 4
        %s1146 = scalar_lea.vmem [#allocation8], %s1145
        // Predicated region
        $region69: #{tpu_custom_call.1} parent=59 // pred_check
          %p1147 = pneg %p269
        $region70: #{tpu_custom_call.1} parent=59 // pred_check_branch
          %1149 = sbr.rel (%p1147) target = $region72
        $region71: #{tpu_custom_call.1} parent=59 // pred_region
          %s1150 = smul.u32 4, %s31
          %1152 = vsyncadd %s1143, 0
          %s1153 = scalar_lea.hbm %s10, %s1150
          %s1155 = sshll.u32 %s1146, 4
          %s1156 = int_to_ptr.vmem [resolvable:$true] %s1155
          %s1157 = sshll.u32 %s1153, 4
          %s1158 = int_to_ptr.hbm [resolvable:$true] %s1157
          %1160 = dma.vmem_to_hbm [thread:$0]  %s1156, 64, %s1158, %s1143
        $region72: #{tpu_custom_call.1} parent=59 // pred_fallthru
          _
      $region60: #{tpu_custom_call.1} parent=5 // pred_fallthru
        _
      %p1161 = scmp.le.s32.totalorder 2, %s26
      // Predicated region
      $region73: #{tpu_custom_call.1} parent=5 // pred_check
        %p1162 = pneg %p1161
      $region74: #{tpu_custom_call.1} parent=5 // pred_check_branch
        %1164 = sbr.rel (%p1162) target = $region76
      $region75: #{tpu_custom_call.1} parent=5 // pred_region
        %s1165 = ssub.s32 %s26, 2
        // Predicated region
        $region77: #{tpu_custom_call.1} parent=75 // pred_check
          %p1166 = pneg %p275
        $region78: #{tpu_custom_call.1} parent=75 // pred_check_branch
          %1168 = sbr.rel (%p1166) target = $region80
        $region79: #{tpu_custom_call.1} parent=75 // pred_region
          %s1169 = sand.u32 %s260, 1
          %s1170 = scalar_lea.sflag [#allocation5], %s1169
          %s1171 = sand.u32 %s260, 1
          %s1172 = smul.addr %s1171, 4
          %s1173 = scalar_lea.vmem [#allocation8], %s1172
          %1175 = dma.done %s1170, 64
        $region80: #{tpu_custom_call.1} parent=75 // pred_fallthru
          _
      $region76: #{tpu_custom_call.1} parent=5 // pred_fallthru
        _
    $region6: #{tpu_custom_call.1} parent=1 // loop_footer
      %s30 = sadd.s32 1, %s26
    $region7: #{tpu_custom_call.1} parent=1 // loop_footer_branch
      %25 = sbr.rel target = $region3
    $region8: #{tpu_custom_call.1} parent=1 // loop_exit
      _
    %1176 = vsyncpa [#allocation4], 1
    %s1177 = scalar_lea.sflag [#allocation4], 1
    %1178 = vsyncpa %s1177, 1
    %1179 = vsyncpa [#allocation7], 1
    %s1180 = scalar_lea.sflag [#allocation7], 1
    %1181 = vsyncpa %s1180, 1
    %1182 = vsyncpa [#allocation5], 1
    %s1183 = scalar_lea.sflag [#allocation5], 1
    %1184 = vsyncpa %s1183, 1

</llo_original>
